<compile_context>
chip_gen: v7x
topology: tpu7x:2x2x1
jax: 0.10.0
libtpu: 0.0.40
codegen_flags: <defaults>
</compile_context>

<pallas_src>
import functools

import jax
import jax.numpy as jnp
from jax.experimental import pallas as pl
from jax.experimental.pallas import tpu as pltpu

# ----------------------------- configuration --------------------------------
LATENT_DIM = 16
HIDDEN_DIMS = [32, 32, 32, 64]
NUM_POINTS = 16
POINT_DIM = 3
BATCH = 2
BN_EPS = 1e-5
PAD = 128  # lane-dense feature padding


def _round_up(n, m):
    return ((n + m - 1) // m) * m


# ------------------------------- kernel -------------------------------------
def _generator_kernel(num_hidden, z_ref, w_ref, v_ref, out_ref):
    """z_ref: [B, 128] (latent zero-padded), w_ref: [(H+1)*128, 128] weight slab,
    v_ref: [16, 128] vector slab (rows 2i=gamma_i, 2i+1=beta_i, 2H=out bias)."""
    x = z_ref[...].astype(jnp.float32)

    # Hidden layers: Linear (no bias; BN cancels it) -> BatchNorm1d -> ReLU.
    for i in range(num_hidden):
        w = w_ref[i * PAD:(i + 1) * PAD, :]                      # [128, 128] static slice
        h = jnp.dot(x, w, preferred_element_type=jnp.float32)    # [B, 128]
        mean = jnp.mean(h, axis=0, keepdims=True)                # batch stats
        xc = h - mean
        var = jnp.mean(xc * xc, axis=0, keepdims=True)           # biased variance
        g = v_ref[2 * i:2 * i + 1, :]                            # [1, 128]
        bt = v_ref[2 * i + 1:2 * i + 2, :]                       # [1, 128]
        scale = g * jax.lax.rsqrt(var + BN_EPS)                  # folded gamma/inv-std
        x = jnp.maximum(xc * scale + bt, 0.0)                    # padded lanes stay 0

    # Output layer: Linear -> tanh (padded output lanes stay 0, sliced off outside).
    w_out = w_ref[num_hidden * PAD:(num_hidden + 1) * PAD, :]
    b_out = v_ref[2 * num_hidden:2 * num_hidden + 1, :]
    y = jnp.dot(x, w_out, preferred_element_type=jnp.float32) + b_out
    out_ref[...] = jnp.tanh(y)


# ------------------------------- wrapper -------------------------------------
def point_cloud_generator(z, w_slab, v_slab, num_hidden,
                          num_points=NUM_POINTS, point_dim=POINT_DIM):
    """z: [B, latent_dim] f32. w_slab/v_slab: packed parameter slabs."""
    batch, latent = z.shape
    out_dim = num_points * point_dim

    z_pad = jnp.pad(z, ((0, 0), (0, PAD - latent))) if latent < PAD else z

    vmem = pl.BlockSpec(memory_space=pltpu.MemorySpace.VMEM)
    flat = pl.pallas_call(
        functools.partial(_generator_kernel, num_hidden),
        out_shape=jax.ShapeDtypeStruct((batch, PAD), jnp.float32),
        in_specs=[vmem, vmem, vmem],
        out_specs=vmem,
    )(z_pad, w_slab, v_slab)

    return flat[:, :out_dim].reshape(batch, num_points, point_dim)


# --------------------------- parameter setup ---------------------------------
def init_params(key, latent_dim, hidden_dims, num_points, point_dim):
    """PyTorch-style init: Linear ~ U(-1/sqrt(in), 1/sqrt(in)); BN gamma=1, beta=0.
    Weights stored as [in, out] (transpose of PyTorch's [out, in])."""
    params = []
    in_dim = latent_dim
    for out_dim in hidden_dims:
        key, kw, kb = jax.random.split(key, 3)
        bound = 1.0 / (in_dim ** 0.5)
        w = jax.random.uniform(kw, (in_dim, out_dim), jnp.float32, -bound, bound)
        b = jax.random.uniform(kb, (out_dim,), jnp.float32, -bound, bound)
        gamma = jnp.ones((out_dim,), jnp.float32)
        beta = jnp.zeros((out_dim,), jnp.float32)
        params += [w, b, gamma, beta]
        in_dim = out_dim
    key, kw, kb = jax.random.split(key, 3)
    out_dim = num_points * point_dim
    bound = 1.0 / (in_dim ** 0.5)
    w_out = jax.random.uniform(kw, (in_dim, out_dim), jnp.float32, -bound, bound)
    b_out = jax.random.uniform(kb, (out_dim,), jnp.float32, -bound, bound)
    params += [w_out, b_out]
    return params


def pack_params(params, latent_dim, hidden_dims, out_dim):
    """Pack per-layer params into (w_slab, v_slab), zero-padded to 128 lanes.
    Hidden-layer biases are intentionally omitted (exactly cancelled by BN)."""
    num_hidden = len(hidden_dims)
    w_slab = jnp.zeros(((num_hidden + 1) * PAD, PAD), jnp.float32)
    v_rows = _round_up(2 * num_hidden + 1, 8)
    v_slab = jnp.zeros((v_rows, PAD), jnp.float32)

    in_dim = latent_dim
    for i, out_d in enumerate(hidden_dims):
        w, _b, g, bt = params[4 * i: 4 * i + 4]
        w_slab = w_slab.at[i * PAD: i * PAD + in_dim, :out_d].set(w)
        v_slab = v_slab.at[2 * i, :out_d].set(g)
        v_slab = v_slab.at[2 * i + 1, :out_d].set(bt)
        in_dim = out_d

    w_out, b_out = params[-2], params[-1]
    w_slab = w_slab.at[num_hidden * PAD: num_hidden * PAD + in_dim, :out_dim].set(w_out)
    v_slab = v_slab.at[2 * num_hidden, :out_dim].set(b_out)
    return w_slab, v_slab


# ------------------------------ reference ------------------------------------
def reference_forward(z, params, num_points=NUM_POINTS, point_dim=POINT_DIM):
    """Pure-JAX reference with full PyTorch semantics (hidden biases included)."""
    num_hidden = (len(params) - 2) // 4
    x = z.astype(jnp.float32)
    for i in range(num_hidden):
        w, b, g, bt = params[4 * i: 4 * i + 4]
        h = x @ w + b
        mean = jnp.mean(h, axis=0, keepdims=True)
        var = jnp.mean((h - mean) ** 2, axis=0, keepdims=True)
        h = (h - mean) / jnp.sqrt(var + BN_EPS)
        h = h * g + bt
        x = jnp.maximum(h, 0.0)
    y = x @ params[-2] + params[-1]
    return jnp.tanh(y).reshape(z.shape[0], num_points, point_dim)


# --------------------------------- main ---------------------------------------
if __name__ == "__main__":
    key = jax.random.PRNGKey(0)
    key, kz, kp = jax.random.split(key, 3)

    z = jax.random.normal(kz, (BATCH, LATENT_DIM), dtype=jnp.float32)
    params = init_params(kp, LATENT_DIM, HIDDEN_DIMS, NUM_POINTS, POINT_DIM)
    w_slab, v_slab = pack_params(params, LATENT_DIM, HIDDEN_DIMS,
                                 NUM_POINTS * POINT_DIM)

    out = point_cloud_generator(z, w_slab, v_slab, num_hidden=len(HIDDEN_DIMS))
    out = jax.block_until_ready(out)

    assert out.shape == (BATCH, NUM_POINTS, POINT_DIM), out.shape

    ref = reference_forward(z, params)
    err = float(jnp.max(jnp.abs(out - ref)))
    # Training-mode BN at B=2 sits on the eps floor for near-tied columns, which
    # amplifies benign fp reassociation (bias cancellation / gamma*rsqrt fold);
    # 2e-4 keeps a safe margin over the observed ~1e-6 typical error.
    if err > 2e-4:
        raise AssertionError(f"mismatch vs reference, max abs err = {err}")

    print("KERNEL_OK")
</pallas_src>

<mosaic_0001>
module attributes {stable_mosaic.version = 11 : i64} {
  func.func @_generator_kernel(%arg0: memref<2x128xf32, #tpu.memory_space<vmem>>, %arg1: memref<640x128xf32, #tpu.memory_space<vmem>>, %arg2: memref<16x128xf32, #tpu.memory_space<vmem>>, %arg3: memref<2x128xf32, #tpu.memory_space<vmem>>) attributes {dimension_semantics = [], scalar_prefetch = 0 : i64, scratch_operands = 0 : i64, tpu.core_type = #tpu.core_type<tc>} {
    %c0 = arith.constant 0 : index
    %c0_0 = arith.constant 0 : index
    %0 = vector.load %arg0[%c0, %c0_0] : memref<2x128xf32, #tpu.memory_space<vmem>>, vector<2x128xf32>
    %c0_1 = arith.constant 0 : index
    %c0_2 = arith.constant 0 : index
    %1 = vector.load %arg1[%c0_1, %c0_2] : memref<640x128xf32, #tpu.memory_space<vmem>>, vector<128x128xf32>
    %cst = arith.constant dense<0.000000e+00> : vector<2x128xf32>
    %2 = tpu.matmul %0, %1, %cst {dimension_numbers = #tpu.dot_dimension_numbers<[1], [0], [0], [1], [0, 0, 1, 1], [], []>} : vector<2x128xf32>, vector<128x128xf32>, vector<2x128xf32> -> vector<2x128xf32>
    %cst_3 = arith.constant dense<0.000000e+00> : vector<128xf32>
    %3 = vector.multi_reduction <add>, %2, %cst_3 [0] : vector<2x128xf32> to vector<128xf32>
    %4 = vector.shape_cast %3 : vector<128xf32> to vector<1x128xf32>
    %cst_4 = arith.constant 2.000000e+00 : f32
    %5 = vector.broadcast %cst_4 : f32 to vector<1x128xf32>
    %6 = arith.divf %4, %5 : vector<1x128xf32>
    %7 = vector.broadcast %6 : vector<1x128xf32> to vector<2x128xf32>
    %8 = arith.subf %2, %7 : vector<2x128xf32>
    %9 = arith.mulf %8, %8 : vector<2x128xf32>
    %cst_5 = arith.constant dense<0.000000e+00> : vector<128xf32>
    %10 = vector.multi_reduction <add>, %9, %cst_5 [0] : vector<2x128xf32> to vector<128xf32>
    %11 = vector.shape_cast %10 : vector<128xf32> to vector<1x128xf32>
    %cst_6 = arith.constant 2.000000e+00 : f32
    %12 = vector.broadcast %cst_6 : f32 to vector<1x128xf32>
    %13 = arith.divf %11, %12 : vector<1x128xf32>
    %c0_7 = arith.constant 0 : index
    %c0_8 = arith.constant 0 : index
    %14 = vector.load %arg2[%c0_7, %c0_8] : memref<16x128xf32, #tpu.memory_space<vmem>>, vector<1x128xf32>
    %c1 = arith.constant 1 : index
    %c0_9 = arith.constant 0 : index
    %15 = vector.load %arg2[%c1, %c0_9] : memref<16x128xf32, #tpu.memory_space<vmem>>, vector<1x128xf32>
    %cst_10 = arith.constant 9.99999974E-6 : f32
    %16 = vector.broadcast %cst_10 : f32 to vector<1x128xf32>
    %17 = arith.addf %13, %16 : vector<1x128xf32>
    %18 = math.rsqrt %17 : vector<1x128xf32>
    %19 = arith.mulf %14, %18 : vector<1x128xf32>
    %20 = vector.broadcast %19 : vector<1x128xf32> to vector<2x128xf32>
    %21 = arith.mulf %8, %20 : vector<2x128xf32>
    %22 = vector.broadcast %15 : vector<1x128xf32> to vector<2x128xf32>
    %23 = arith.addf %21, %22 : vector<2x128xf32>
    %cst_11 = arith.constant 0.000000e+00 : f32
    %24 = vector.broadcast %cst_11 : f32 to vector<2x128xf32>
    %25 = arith.maximumf %23, %24 : vector<2x128xf32>
    %c128 = arith.constant 128 : index
    %c0_12 = arith.constant 0 : index
    %26 = vector.load %arg1[%c128, %c0_12] : memref<640x128xf32, #tpu.memory_space<vmem>>, vector<128x128xf32>
    %cst_13 = arith.constant dense<0.000000e+00> : vector<2x128xf32>
    %27 = tpu.matmul %25, %26, %cst_13 {dimension_numbers = #tpu.dot_dimension_numbers<[1], [0], [0], [1], [0, 0, 1, 1], [], []>} : vector<2x128xf32>, vector<128x128xf32>, vector<2x128xf32> -> vector<2x128xf32>
    %cst_14 = arith.constant dense<0.000000e+00> : vector<128xf32>
    %28 = vector.multi_reduction <add>, %27, %cst_14 [0] : vector<2x128xf32> to vector<128xf32>
    %29 = vector.shape_cast %28 : vector<128xf32> to vector<1x128xf32>
    %cst_15 = arith.constant 2.000000e+00 : f32
    %30 = vector.broadcast %cst_15 : f32 to vector<1x128xf32>
    %31 = arith.divf %29, %30 : vector<1x128xf32>
    %32 = vector.broadcast %31 : vector<1x128xf32> to vector<2x128xf32>
    %33 = arith.subf %27, %32 : vector<2x128xf32>
    %34 = arith.mulf %33, %33 : vector<2x128xf32>
    %cst_16 = arith.constant dense<0.000000e+00> : vector<128xf32>
    %35 = vector.multi_reduction <add>, %34, %cst_16 [0] : vector<2x128xf32> to vector<128xf32>
    %36 = vector.shape_cast %35 : vector<128xf32> to vector<1x128xf32>
    %cst_17 = arith.constant 2.000000e+00 : f32
    %37 = vector.broadcast %cst_17 : f32 to vector<1x128xf32>
    %38 = arith.divf %36, %37 : vector<1x128xf32>
    %c2 = arith.constant 2 : index
    %c0_18 = arith.constant 0 : index
    %39 = vector.load %arg2[%c2, %c0_18] : memref<16x128xf32, #tpu.memory_space<vmem>>, vector<1x128xf32>
    %c3 = arith.constant 3 : index
    %c0_19 = arith.constant 0 : index
    %40 = vector.load %arg2[%c3, %c0_19] : memref<16x128xf32, #tpu.memory_space<vmem>>, vector<1x128xf32>
    %cst_20 = arith.constant 9.99999974E-6 : f32
    %41 = vector.broadcast %cst_20 : f32 to vector<1x128xf32>
    %42 = arith.addf %38, %41 : vector<1x128xf32>
    %43 = math.rsqrt %42 : vector<1x128xf32>
    %44 = arith.mulf %39, %43 : vector<1x128xf32>
    %45 = vector.broadcast %44 : vector<1x128xf32> to vector<2x128xf32>
    %46 = arith.mulf %33, %45 : vector<2x128xf32>
    %47 = vector.broadcast %40 : vector<1x128xf32> to vector<2x128xf32>
    %48 = arith.addf %46, %47 : vector<2x128xf32>
    %cst_21 = arith.constant 0.000000e+00 : f32
    %49 = vector.broadcast %cst_21 : f32 to vector<2x128xf32>
    %50 = arith.maximumf %48, %49 : vector<2x128xf32>
    %c256 = arith.constant 256 : index
    %c0_22 = arith.constant 0 : index
    %51 = vector.load %arg1[%c256, %c0_22] : memref<640x128xf32, #tpu.memory_space<vmem>>, vector<128x128xf32>
    %cst_23 = arith.constant dense<0.000000e+00> : vector<2x128xf32>
    %52 = tpu.matmul %50, %51, %cst_23 {dimension_numbers = #tpu.dot_dimension_numbers<[1], [0], [0], [1], [0, 0, 1, 1], [], []>} : vector<2x128xf32>, vector<128x128xf32>, vector<2x128xf32> -> vector<2x128xf32>
    %cst_24 = arith.constant dense<0.000000e+00> : vector<128xf32>
    %53 = vector.multi_reduction <add>, %52, %cst_24 [0] : vector<2x128xf32> to vector<128xf32>
    %54 = vector.shape_cast %53 : vector<128xf32> to vector<1x128xf32>
    %cst_25 = arith.constant 2.000000e+00 : f32
    %55 = vector.broadcast %cst_25 : f32 to vector<1x128xf32>
    %56 = arith.divf %54, %55 : vector<1x128xf32>
    %57 = vector.broadcast %56 : vector<1x128xf32> to vector<2x128xf32>
    %58 = arith.subf %52, %57 : vector<2x128xf32>
    %59 = arith.mulf %58, %58 : vector<2x128xf32>
    %cst_26 = arith.constant dense<0.000000e+00> : vector<128xf32>
    %60 = vector.multi_reduction <add>, %59, %cst_26 [0] : vector<2x128xf32> to vector<128xf32>
    %61 = vector.shape_cast %60 : vector<128xf32> to vector<1x128xf32>
    %cst_27 = arith.constant 2.000000e+00 : f32
    %62 = vector.broadcast %cst_27 : f32 to vector<1x128xf32>
    %63 = arith.divf %61, %62 : vector<1x128xf32>
    %c4 = arith.constant 4 : index
    %c0_28 = arith.constant 0 : index
    %64 = vector.load %arg2[%c4, %c0_28] : memref<16x128xf32, #tpu.memory_space<vmem>>, vector<1x128xf32>
    %c5 = arith.constant 5 : index
    %c0_29 = arith.constant 0 : index
    %65 = vector.load %arg2[%c5, %c0_29] : memref<16x128xf32, #tpu.memory_space<vmem>>, vector<1x128xf32>
    %cst_30 = arith.constant 9.99999974E-6 : f32
    %66 = vector.broadcast %cst_30 : f32 to vector<1x128xf32>
    %67 = arith.addf %63, %66 : vector<1x128xf32>
    %68 = math.rsqrt %67 : vector<1x128xf32>
    %69 = arith.mulf %64, %68 : vector<1x128xf32>
    %70 = vector.broadcast %69 : vector<1x128xf32> to vector<2x128xf32>
    %71 = arith.mulf %58, %70 : vector<2x128xf32>
    %72 = vector.broadcast %65 : vector<1x128xf32> to vector<2x128xf32>
    %73 = arith.addf %71, %72 : vector<2x128xf32>
    %cst_31 = arith.constant 0.000000e+00 : f32
    %74 = vector.broadcast %cst_31 : f32 to vector<2x128xf32>
    %75 = arith.maximumf %73, %74 : vector<2x128xf32>
    %c384 = arith.constant 384 : index
    %c0_32 = arith.constant 0 : index
    %76 = vector.load %arg1[%c384, %c0_32] : memref<640x128xf32, #tpu.memory_space<vmem>>, vector<128x128xf32>
    %cst_33 = arith.constant dense<0.000000e+00> : vector<2x128xf32>
    %77 = tpu.matmul %75, %76, %cst_33 {dimension_numbers = #tpu.dot_dimension_numbers<[1], [0], [0], [1], [0, 0, 1, 1], [], []>} : vector<2x128xf32>, vector<128x128xf32>, vector<2x128xf32> -> vector<2x128xf32>
    %cst_34 = arith.constant dense<0.000000e+00> : vector<128xf32>
    %78 = vector.multi_reduction <add>, %77, %cst_34 [0] : vector<2x128xf32> to vector<128xf32>
    %79 = vector.shape_cast %78 : vector<128xf32> to vector<1x128xf32>
    %cst_35 = arith.constant 2.000000e+00 : f32
    %80 = vector.broadcast %cst_35 : f32 to vector<1x128xf32>
    %81 = arith.divf %79, %80 : vector<1x128xf32>
    %82 = vector.broadcast %81 : vector<1x128xf32> to vector<2x128xf32>
    %83 = arith.subf %77, %82 : vector<2x128xf32>
    %84 = arith.mulf %83, %83 : vector<2x128xf32>
    %cst_36 = arith.constant dense<0.000000e+00> : vector<128xf32>
    %85 = vector.multi_reduction <add>, %84, %cst_36 [0] : vector<2x128xf32> to vector<128xf32>
    %86 = vector.shape_cast %85 : vector<128xf32> to vector<1x128xf32>
    %cst_37 = arith.constant 2.000000e+00 : f32
    %87 = vector.broadcast %cst_37 : f32 to vector<1x128xf32>
    %88 = arith.divf %86, %87 : vector<1x128xf32>
    %c6 = arith.constant 6 : index
    %c0_38 = arith.constant 0 : index
    %89 = vector.load %arg2[%c6, %c0_38] : memref<16x128xf32, #tpu.memory_space<vmem>>, vector<1x128xf32>
    %c7 = arith.constant 7 : index
    %c0_39 = arith.constant 0 : index
    %90 = vector.load %arg2[%c7, %c0_39] : memref<16x128xf32, #tpu.memory_space<vmem>>, vector<1x128xf32>
    %cst_40 = arith.constant 9.99999974E-6 : f32
    %91 = vector.broadcast %cst_40 : f32 to vector<1x128xf32>
    %92 = arith.addf %88, %91 : vector<1x128xf32>
    %93 = math.rsqrt %92 : vector<1x128xf32>
    %94 = arith.mulf %89, %93 : vector<1x128xf32>
    %95 = vector.broadcast %94 : vector<1x128xf32> to vector<2x128xf32>
    %96 = arith.mulf %83, %95 : vector<2x128xf32>
    %97 = vector.broadcast %90 : vector<1x128xf32> to vector<2x128xf32>
    %98 = arith.addf %96, %97 : vector<2x128xf32>
    %cst_41 = arith.constant 0.000000e+00 : f32
    %99 = vector.broadcast %cst_41 : f32 to vector<2x128xf32>
    %100 = arith.maximumf %98, %99 : vector<2x128xf32>
    %c512 = arith.constant 512 : index
    %c0_42 = arith.constant 0 : index
    %101 = vector.load %arg1[%c512, %c0_42] : memref<640x128xf32, #tpu.memory_space<vmem>>, vector<128x128xf32>
    %c8 = arith.constant 8 : index
    %c0_43 = arith.constant 0 : index
    %102 = vector.load %arg2[%c8, %c0_43] : memref<16x128xf32, #tpu.memory_space<vmem>>, vector<1x128xf32>
    %cst_44 = arith.constant dense<0.000000e+00> : vector<2x128xf32>
    %103 = tpu.matmul %100, %101, %cst_44 {dimension_numbers = #tpu.dot_dimension_numbers<[1], [0], [0], [1], [0, 0, 1, 1], [], []>} : vector<2x128xf32>, vector<128x128xf32>, vector<2x128xf32> -> vector<2x128xf32>
    %104 = vector.broadcast %102 : vector<1x128xf32> to vector<2x128xf32>
    %105 = arith.addf %103, %104 : vector<2x128xf32>
    %106 = math.tanh %105 : vector<2x128xf32>
    %c0_45 = arith.constant 0 : index
    %c0_46 = arith.constant 0 : index
    %107 = vector.load %arg3[%c0_45, %c0_46] : memref<2x128xf32, #tpu.memory_space<vmem>>, vector<2x128xf32>
    tpu.vector_store %arg3[%c0_45, %c0_46], %106 {strides = array<i32>} : memref<2x128xf32, #tpu.memory_space<vmem>>, vector<2x128xf32>,
    return
  }
}

</mosaic_0001>

<llo_original>
// kernel: tpu_custom_call.1
$region0: #{tpu_custom_call.1}
  #allocation0 [shape = 'u32[]', space=smem, size = 0x4, offset = 0x4, fixed_abs, tag = 'smem constant byte address 0x4 - core index']
  #allocation1 [shape = 'u32[144,128]{1,0:T(1,128)}', space=vmem, size = 0x12000, scoped, tag = 'internal scratch']
  %s0 = inlined_call_operand.hbm [shape: f32[2,128], index: 0, kind: input, shape index: {}]
  %s1 = inlined_call_operand.hbm [shape: f32[640,128], index: 1, kind: input, shape index: {}]
  %s2 = inlined_call_operand.hbm [shape: f32[16,128], index: 2, kind: input, shape index: {}]
  %s3 = inlined_call_operand.hbm [shape: f32[2,128], index: 3, kind: output, shape index: {}]
  %s4 = sld [smem:[#allocation0]]
  $region34: #{tpu_custom_call.1} parent=0
    _
  %s6 = ssub.s32 1, %s4
  %s7 = scalar_select 0, %s6, %s4
  $region1: #{tpu_custom_call.1} parent=0
    #allocation2 [shape = 'u8[1024]{0}', space=vmem, size = 0x400, scoped, tag = 'input window, operand 0, single buffered']
    #allocation3 [shape = 's32[1]{0}', space=sflag, size = 0x4, scoped, tag = 'scoped memory for tpu_custom_call.1']
    #allocation4 [shape = 's32[1]{0}', space=sflag, size = 0x4, scoped, tag = 'scoped memory for tpu_custom_call.1']
    #allocation5 [shape = 'u8[327680]{0}', space=vmem, size = 0x50000, scoped, tag = 'input window, operand 1, single buffered']
    #allocation6 [shape = 's32[1]{0}', space=sflag, size = 0x4, scoped, tag = 'scoped memory for tpu_custom_call.1']
    #allocation7 [shape = 'u8[8192]{0}', space=vmem, size = 0x2000, scoped, tag = 'input window, operand 2, single buffered']
    #allocation8 [shape = 'u8[1024]{0}', space=vmem, size = 0x400, scoped, tag = 'output window, operand 0, single buffered']
    %8 = vsyncpa [#allocation3], 0
    %9 = vsyncpa [#allocation6], 0
    %10 = vsyncpa [#allocation4], 0
    // Predicated region
    $region2: #{tpu_custom_call.1} parent=1 // pred_check
      _
    $region3: #{tpu_custom_call.1} parent=1 // pred_check_branch
      %12 = sbr.rel (0) target = $region5
    $region4: #{tpu_custom_call.1} parent=1 // pred_region
      %s14 = ssub.s32 32, 32
      %15 = vsyncadd [#allocation3], %s14
      %s17 = sshll.u32 [#allocation2], 4
      %s18 = int_to_ptr.vmem [resolvable:$true] %s17
      %20 = dma.hbm_to_vmem [thread:$0]  %s0, 32, %s18, [#allocation3]
    $region5: #{tpu_custom_call.1} parent=1 // pred_fallthru
      _
    // Predicated region
    $region6: #{tpu_custom_call.1} parent=1 // pred_check
      _
    $region7: #{tpu_custom_call.1} parent=1 // pred_check_branch
      %22 = sbr.rel (0) target = $region9
    $region8: #{tpu_custom_call.1} parent=1 // pred_region
      %s24 = ssub.s32 10240, 10240
      %25 = vsyncadd [#allocation6], %s24
      %s26 = sshll.u32 [#allocation5], 4
      %s27 = int_to_ptr.vmem [resolvable:$true] %s26
      %32 = dma.hbm_to_vmem [thread:$0]  %s1, 10240, %s27, [#allocation6], 128, 128, 8
    $region9: #{tpu_custom_call.1} parent=1 // pred_fallthru
      _
    // Predicated region
    $region10: #{tpu_custom_call.1} parent=1 // pred_check
      _
    $region11: #{tpu_custom_call.1} parent=1 // pred_check_branch
      %34 = sbr.rel (0) target = $region13
    $region12: #{tpu_custom_call.1} parent=1 // pred_region
      %s36 = ssub.s32 256, 256
      %37 = vsyncadd [#allocation6], %s36
      %s38 = sshll.u32 [#allocation7], 4
      %s39 = int_to_ptr.vmem [resolvable:$true] %s38
      %44 = dma.hbm_to_vmem [thread:$0]  %s2, 256, %s39, [#allocation6], 128, 128, 8
    $region13: #{tpu_custom_call.1} parent=1 // pred_fallthru
      _
    // Predicated region
    $region14: #{tpu_custom_call.1} parent=1 // pred_check
      _
    $region15: #{tpu_custom_call.1} parent=1 // pred_check_branch
      %46 = sbr.rel (0) target = $region17
    $region16: #{tpu_custom_call.1} parent=1 // pred_region
      %47 = dma.done [#allocation3], 32
    $region17: #{tpu_custom_call.1} parent=1 // pred_fallthru
      _
    // Predicated region
    $region18: #{tpu_custom_call.1} parent=1 // pred_check
      _
    $region19: #{tpu_custom_call.1} parent=1 // pred_check_branch
      %49 = sbr.rel (0) target = $region21
    $region20: #{tpu_custom_call.1} parent=1 // pred_region
      %50 = dma.done [#allocation6], 10240
    $region21: #{tpu_custom_call.1} parent=1 // pred_fallthru
      _
    // Predicated region
    $region22: #{tpu_custom_call.1} parent=1 // pred_check
      _
    $region23: #{tpu_custom_call.1} parent=1 // pred_check_branch
      %52 = sbr.rel (0) target = $region25
    $region24: #{tpu_custom_call.1} parent=1 // pred_region
      %53 = dma.done [#allocation6], 256
    $region25: #{tpu_custom_call.1} parent=1 // pred_fallthru
      _
    %v54 = vld [vmem:[#allocation2] sm:$0x3]
    %v55 = vld [vmem:[#allocation5] sm:$0xff]
    %v56 = vld [vmem:[#allocation5 + $0x8] sm:$0xff]
    %v57 = vld [vmem:[#allocation5 + $0x10] sm:$0xff]
    %v58 = vld [vmem:[#allocation5 + $0x18] sm:$0xff]
    %v59 = vld [vmem:[#allocation5 + $0x20] sm:$0xff]
    %v60 = vld [vmem:[#allocation5 + $0x28] sm:$0xff]
    %v61 = vld [vmem:[#allocation5 + $0x30] sm:$0xff]
    %v62 = vld [vmem:[#allocation5 + $0x38] sm:$0xff]
    %v63 = vld [vmem:[#allocation5 + $0x40] sm:$0xff]
    %v64 = vld [vmem:[#allocation5 + $0x48] sm:$0xff]
    %v65 = vld [vmem:[#allocation5 + $0x50] sm:$0xff]
    %v66 = vld [vmem:[#allocation5 + $0x58] sm:$0xff]
    %v67 = vld [vmem:[#allocation5 + $0x60] sm:$0xff]
    %v68 = vld [vmem:[#allocation5 + $0x68] sm:$0xff]
    %v69 = vld [vmem:[#allocation5 + $0x70] sm:$0xff]
    %v70 = vld [vmem:[#allocation5 + $0x78] sm:$0xff]
    %71 = vmatprep.subr.mxu0 0.0
    %72 = vmatpush1.msra.mxu0 %v55
    %73 = vmatprep.subr.mxu0 0.0
    %74 = vmatpush1.msra.mxu0 %v56
    %75 = vmatprep.subr.mxu0 0.0
    %76 = vmatpush1.msra.mxu0 %v57
    %77 = vmatprep.subr.mxu0 0.0
    %78 = vmatpush1.msra.mxu0 %v58
    %79 = vmatprep.subr.mxu0 0.0
    %80 = vmatpush1.msra.mxu0 %v59
    %81 = vmatprep.subr.mxu0 0.0
    %82 = vmatpush1.msra.mxu0 %v60
    %83 = vmatprep.subr.mxu0 0.0
    %84 = vmatpush1.msra.mxu0 %v61
    %85 = vmatprep.subr.mxu0 0.0
    %86 = vmatpush1.msra.mxu0 %v62
    %87 = vmatprep.subr.mxu0 0.0
    %88 = vmatpush1.msra.mxu0 %v63
    %89 = vmatprep.subr.mxu0 0.0
    %90 = vmatpush1.msra.mxu0 %v64
    %91 = vmatprep.subr.mxu0 0.0
    %92 = vmatpush1.msra.mxu0 %v65
    %93 = vmatprep.subr.mxu0 0.0
    %94 = vmatpush1.msra.mxu0 %v66
    %95 = vmatprep.subr.mxu0 0.0
    %96 = vmatpush1.msra.mxu0 %v67
    %97 = vmatprep.subr.mxu0 0.0
    %98 = vmatpush1.msra.mxu0 %v68
    %99 = vmatprep.subr.mxu0 0.0
    %100 = vmatpush1.msra.mxu0 %v69
    %101 = vmatprep.subr.mxu0 0.0
    %102 = vmatpush1.msra.mxu0 %v70
    %103 = vmatprep.subr.mxu0 0.0
    %104 = vmatpush1.msra.mxu0 0.0
    %105 = vmatprep.subr.mxu0 0.0
    %106 = vmatpush1.msra.mxu0 0.0
    %107 = vmatprep.subr.mxu0 0.0
    %108 = vmatpush1.msra.mxu0 0.0
    %109 = vmatprep.subr.mxu0 0.0
    %110 = vmatpush1.msra.mxu0 0.0
    %111 = vmatprep.subr.mxu0 0.0
    %112 = vmatpush1.msra.mxu0 0.0
    %113 = vmatprep.subr.mxu0 0.0
    %114 = vmatpush1.msra.mxu0 0.0
    %115 = vmatprep.subr.mxu0 0.0
    %116 = vmatpush1.msra.mxu0 0.0
    %117 = vmatprep.subr.mxu0 0.0
    %118 = vmatpush1.msra.mxu0 0.0
    %119 = vmatprep.subr.mxu0 0.0
    %120 = vmatpush1.msra.mxu0 0.0
    %121 = vmatprep.subr.mxu0 0.0
    %122 = vmatpush1.msra.mxu0 0.0
    %123 = vmatprep.subr.mxu0 0.0
    %124 = vmatpush1.msra.mxu0 0.0
    %125 = vmatprep.subr.mxu0 0.0
    %126 = vmatpush1.msra.mxu0 0.0
    %127 = vmatprep.subr.mxu0 0.0
    %128 = vmatpush1.msra.mxu0 0.0
    %129 = vmatprep.subr.mxu0 0.0
    %130 = vmatpush1.msra.mxu0 0.0
    %131 = vmatprep.subr.mxu0 0.0
    %132 = vmatpush1.msra.mxu0 0.0
    %133 = vmatprep.subr.mxu0 0.0
    %134 = vmatpush1.msra.mxu0 0.0
    %135 = vmatprep.mubr.f32.mxu0 0.0
    %136 = vmatmul.mubr.f32.gmra.mrb[0].mxu0 %v54
    %v137 = vpop.f32.mrb[0].mxu0
    %v138 = vadd.f32 0.0, %v137
    %v139 = vpop.f32.mrb[0].mxu0
    %140 = vdwg.mxu0
    %vm141 = vcmask 1041408
    %v142 = vsel %vm141, %v138, 0.0
    %v143 = vrot.slane %v142, 4
    %v144 = vadd.f32 %v142, %v143
    %v145 = vrot.slane %v144, 2
    %v146 = vadd.f32 %v144, %v145
    %v147 = vrot.slane %v146, 1
    %v148 = vadd.f32 %v146, %v147
    %v149 = vrcp.pop 2.0
    %v150 = vmul.f32 %v148, %v149
    %v151 = vsub.f32 %v138, %v150
    %v152 = vmul.f32 %v151, %v151
    %v153 = vsel %vm141, %v152, 0.0
    %v154 = vrot.slane %v153, 4
    %v155 = vadd.f32 %v153, %v154
    %v156 = vrot.slane %v155, 2
    %v157 = vadd.f32 %v155, %v156
    %v158 = vrot.slane %v157, 1
    %v159 = vadd.f32 %v157, %v158
    %v160 = vmul.f32 %v159, %v149
    %v161 = vld [vmem:[#allocation7] sm:$0x1]
    %v162 = vld [vmem:[#allocation7 + $0x1] sm:$0x1]
    %v163 = vadd.f32 %v160, 1e-05
    %v164 = vrsqrt.pop %v163
    %v165 = vmul.f32 %v161, %v164
    %v166 = vlaneseq
    %v167 = vshrl.u32 %v166, 7
    %v168 = vsub.s32 0, %v167
    %v169 = vrot.slane %v165, %v168
    %v170 = vmul.f32 %v151, %v169
    %v171 = vlaneseq
    %v172 = vshrl.u32 %v171, 7
    %v173 = vsub.s32 0, %v172
    %v174 = vrot.slane %v162, %v173
    %v175 = vadd.f32 %v170, %v174
    %v176 = vmax.f32 %v175, 0.0
    %v177 = vld [vmem:[#allocation5 + $0x80] sm:$0xff]
    %v178 = vld [vmem:[#allocation5 + $0x88] sm:$0xff]
    %v179 = vld [vmem:[#allocation5 + $0x90] sm:$0xff]
    %v180 = vld [vmem:[#allocation5 + $0x98] sm:$0xff]
    %v181 = vld [vmem:[#allocation5 + $0xa0] sm:$0xff]
    %v182 = vld [vmem:[#allocation5 + $0xa8] sm:$0xff]
    %v183 = vld [vmem:[#allocation5 + $0xb0] sm:$0xff]
    %v184 = vld [vmem:[#allocation5 + $0xb8] sm:$0xff]
    %v185 = vld [vmem:[#allocation5 + $0xc0] sm:$0xff]
    %v186 = vld [vmem:[#allocation5 + $0xc8] sm:$0xff]
    %v187 = vld [vmem:[#allocation5 + $0xd0] sm:$0xff]
    %v188 = vld [vmem:[#allocation5 + $0xd8] sm:$0xff]
    %v189 = vld [vmem:[#allocation5 + $0xe0] sm:$0xff]
    %v190 = vld [vmem:[#allocation5 + $0xe8] sm:$0xff]
    %v191 = vld [vmem:[#allocation5 + $0xf0] sm:$0xff]
    %v192 = vld [vmem:[#allocation5 + $0xf8] sm:$0xff]
    %193 = vmatprep.subr.mxu0 0.0
    %194 = vmatpush1.msra.mxu0 %v177
    %195 = vmatprep.subr.mxu0 0.0
    %196 = vmatpush1.msra.mxu0 %v178
    %197 = vmatprep.subr.mxu0 0.0
    %198 = vmatpush1.msra.mxu0 %v179
    %199 = vmatprep.subr.mxu0 0.0
    %200 = vmatpush1.msra.mxu0 %v180
    %201 = vmatprep.subr.mxu0 0.0
    %202 = vmatpush1.msra.mxu0 %v181
    %203 = vmatprep.subr.mxu0 0.0
    %204 = vmatpush1.msra.mxu0 %v182
    %205 = vmatprep.subr.mxu0 0.0
    %206 = vmatpush1.msra.mxu0 %v183
    %207 = vmatprep.subr.mxu0 0.0
    %208 = vmatpush1.msra.mxu0 %v184
    %209 = vmatprep.subr.mxu0 0.0
    %210 = vmatpush1.msra.mxu0 %v185
    %211 = vmatprep.subr.mxu0 0.0
    %212 = vmatpush1.msra.mxu0 %v186
    %213 = vmatprep.subr.mxu0 0.0
    %214 = vmatpush1.msra.mxu0 %v187
    %215 = vmatprep.subr.mxu0 0.0
    %216 = vmatpush1.msra.mxu0 %v188
    %217 = vmatprep.subr.mxu0 0.0
    %218 = vmatpush1.msra.mxu0 %v189
    %219 = vmatprep.subr.mxu0 0.0
    %220 = vmatpush1.msra.mxu0 %v190
    %221 = vmatprep.subr.mxu0 0.0
    %222 = vmatpush1.msra.mxu0 %v191
    %223 = vmatprep.subr.mxu0 0.0
    %224 = vmatpush1.msra.mxu0 %v192
    %225 = vmatprep.subr.mxu0 0.0
    %226 = vmatpush1.msra.mxu0 0.0
    %227 = vmatprep.subr.mxu0 0.0
    %228 = vmatpush1.msra.mxu0 0.0
    %229 = vmatprep.subr.mxu0 0.0
    %230 = vmatpush1.msra.mxu0 0.0
    %231 = vmatprep.subr.mxu0 0.0
    %232 = vmatpush1.msra.mxu0 0.0
    %233 = vmatprep.subr.mxu0 0.0
    %234 = vmatpush1.msra.mxu0 0.0
    %235 = vmatprep.subr.mxu0 0.0
    %236 = vmatpush1.msra.mxu0 0.0
    %237 = vmatprep.subr.mxu0 0.0
    %238 = vmatpush1.msra.mxu0 0.0
    %239 = vmatprep.subr.mxu0 0.0
    %240 = vmatpush1.msra.mxu0 0.0
    %241 = vmatprep.subr.mxu0 0.0
    %242 = vmatpush1.msra.mxu0 0.0
    %243 = vmatprep.subr.mxu0 0.0
    %244 = vmatpush1.msra.mxu0 0.0
    %245 = vmatprep.subr.mxu0 0.0
    %246 = vmatpush1.msra.mxu0 0.0
    %247 = vmatprep.subr.mxu0 0.0
    %248 = vmatpush1.msra.mxu0 0.0
    %249 = vmatprep.subr.mxu0 0.0
    %250 = vmatpush1.msra.mxu0 0.0
    %251 = vmatprep.subr.mxu0 0.0
    %252 = vmatpush1.msra.mxu0 0.0
    %253 = vmatprep.subr.mxu0 0.0
    %254 = vmatpush1.msra.mxu0 0.0
    %255 = vmatprep.subr.mxu0 0.0
    %256 = vmatpush1.msra.mxu0 0.0
    %257 = vmatprep.mubr.f32.mxu0 0.0
    %258 = vmatmul.mubr.f32.gmra.mrb[0].mxu0 %v176
    %v259 = vpop.f32.mrb[0].mxu0
    %v260 = vadd.f32 0.0, %v259
    %v261 = vpop.f32.mrb[0].mxu0
    %262 = vdwg.mxu0
    %v263 = vsel %vm141, %v260, 0.0
    %v264 = vrot.slane %v263, 4
    %v265 = vadd.f32 %v263, %v264
    %v266 = vrot.slane %v265, 2
    %v267 = vadd.f32 %v265, %v266
    %v268 = vrot.slane %v267, 1
    %v269 = vadd.f32 %v267, %v268
    %v270 = vmul.f32 %v269, %v149
    %v271 = vsub.f32 %v260, %v270
    %v272 = vmul.f32 %v271, %v271
    %v273 = vsel %vm141, %v272, 0.0
    %v274 = vrot.slane %v273, 4
    %v275 = vadd.f32 %v273, %v274
    %v276 = vrot.slane %v275, 2
    %v277 = vadd.f32 %v275, %v276
    %v278 = vrot.slane %v277, 1
    %v279 = vadd.f32 %v277, %v278
    %v280 = vmul.f32 %v279, %v149
    %v281 = vld [vmem:[#allocation7 + $0x2] sm:$0x1]
    %v282 = vld [vmem:[#allocation7 + $0x3] sm:$0x1]
    %v283 = vadd.f32 %v280, 1e-05
    %v284 = vrsqrt.pop %v283
    %v285 = vmul.f32 %v281, %v284
    %v286 = vlaneseq
    %v287 = vshrl.u32 %v286, 7
    %v288 = vsub.s32 0, %v287
    %v289 = vrot.slane %v285, %v288
    %v290 = vmul.f32 %v271, %v289
    %v291 = vlaneseq
    %v292 = vshrl.u32 %v291, 7
    %v293 = vsub.s32 0, %v292
    %v294 = vrot.slane %v282, %v293
    %v295 = vadd.f32 %v290, %v294
    %v296 = vmax.f32 %v295, 0.0
    %v297 = vld [vmem:[#allocation5 + $0x100] sm:$0xff]
    %v298 = vld [vmem:[#allocation5 + $0x108] sm:$0xff]
    %v299 = vld [vmem:[#allocation5 + $0x110] sm:$0xff]
    %v300 = vld [vmem:[#allocation5 + $0x118] sm:$0xff]
    %v301 = vld [vmem:[#allocation5 + $0x120] sm:$0xff]
    %v302 = vld [vmem:[#allocation5 + $0x128] sm:$0xff]
    %v303 = vld [vmem:[#allocation5 + $0x130] sm:$0xff]
    %v304 = vld [vmem:[#allocation5 + $0x138] sm:$0xff]
    %v305 = vld [vmem:[#allocation5 + $0x140] sm:$0xff]
    %v306 = vld [vmem:[#allocation5 + $0x148] sm:$0xff]
    %v307 = vld [vmem:[#allocation5 + $0x150] sm:$0xff]
    %v308 = vld [vmem:[#allocation5 + $0x158] sm:$0xff]
    %v309 = vld [vmem:[#allocation5 + $0x160] sm:$0xff]
    %v310 = vld [vmem:[#allocation5 + $0x168] sm:$0xff]
    %v311 = vld [vmem:[#allocation5 + $0x170] sm:$0xff]
    %v312 = vld [vmem:[#allocation5 + $0x178] sm:$0xff]
    %313 = vmatprep.subr.mxu0 0.0
    %314 = vmatpush1.msra.mxu0 %v297
    %315 = vmatprep.subr.mxu0 0.0
    %316 = vmatpush1.msra.mxu0 %v298
    %317 = vmatprep.subr.mxu0 0.0
    %318 = vmatpush1.msra.mxu0 %v299
    %319 = vmatprep.subr.mxu0 0.0
    %320 = vmatpush1.msra.mxu0 %v300
    %321 = vmatprep.subr.mxu0 0.0
    %322 = vmatpush1.msra.mxu0 %v301
    %323 = vmatprep.subr.mxu0 0.0
    %324 = vmatpush1.msra.mxu0 %v302
    %325 = vmatprep.subr.mxu0 0.0
    %326 = vmatpush1.msra.mxu0 %v303
    %327 = vmatprep.subr.mxu0 0.0
    %328 = vmatpush1.msra.mxu0 %v304
    %329 = vmatprep.subr.mxu0 0.0
    %330 = vmatpush1.msra.mxu0 %v305
    %331 = vmatprep.subr.mxu0 0.0
    %332 = vmatpush1.msra.mxu0 %v306
    %333 = vmatprep.subr.mxu0 0.0
    %334 = vmatpush1.msra.mxu0 %v307
    %335 = vmatprep.subr.mxu0 0.0
    %336 = vmatpush1.msra.mxu0 %v308
    %337 = vmatprep.subr.mxu0 0.0
    %338 = vmatpush1.msra.mxu0 %v309
    %339 = vmatprep.subr.mxu0 0.0
    %340 = vmatpush1.msra.mxu0 %v310
    %341 = vmatprep.subr.mxu0 0.0
    %342 = vmatpush1.msra.mxu0 %v311
    %343 = vmatprep.subr.mxu0 0.0
    %344 = vmatpush1.msra.mxu0 %v312
    %345 = vmatprep.subr.mxu0 0.0
    %346 = vmatpush1.msra.mxu0 0.0
    %347 = vmatprep.subr.mxu0 0.0
    %348 = vmatpush1.msra.mxu0 0.0
    %349 = vmatprep.subr.mxu0 0.0
    %350 = vmatpush1.msra.mxu0 0.0
    %351 = vmatprep.subr.mxu0 0.0
    %352 = vmatpush1.msra.mxu0 0.0
    %353 = vmatprep.subr.mxu0 0.0
    %354 = vmatpush1.msra.mxu0 0.0
    %355 = vmatprep.subr.mxu0 0.0
    %356 = vmatpush1.msra.mxu0 0.0
    %357 = vmatprep.subr.mxu0 0.0
    %358 = vmatpush1.msra.mxu0 0.0
    %359 = vmatprep.subr.mxu0 0.0
    %360 = vmatpush1.msra.mxu0 0.0
    %361 = vmatprep.subr.mxu0 0.0
    %362 = vmatpush1.msra.mxu0 0.0
    %363 = vmatprep.subr.mxu0 0.0
    %364 = vmatpush1.msra.mxu0 0.0
    %365 = vmatprep.subr.mxu0 0.0
    %366 = vmatpush1.msra.mxu0 0.0
    %367 = vmatprep.subr.mxu0 0.0
    %368 = vmatpush1.msra.mxu0 0.0
    %369 = vmatprep.subr.mxu0 0.0
    %370 = vmatpush1.msra.mxu0 0.0
    %371 = vmatprep.subr.mxu0 0.0
    %372 = vmatpush1.msra.mxu0 0.0
    %373 = vmatprep.subr.mxu0 0.0
    %374 = vmatpush1.msra.mxu0 0.0
    %375 = vmatprep.subr.mxu0 0.0
    %376 = vmatpush1.msra.mxu0 0.0
    %377 = vmatprep.mubr.f32.mxu0 0.0
    %378 = vmatmul.mubr.f32.gmra.mrb[0].mxu0 %v296
    %v379 = vpop.f32.mrb[0].mxu0
    %v380 = vadd.f32 0.0, %v379
    %v381 = vpop.f32.mrb[0].mxu0
    %382 = vdwg.mxu0
    %v383 = vsel %vm141, %v380, 0.0
    %v384 = vrot.slane %v383, 4
    %v385 = vadd.f32 %v383, %v384
    %v386 = vrot.slane %v385, 2
    %v387 = vadd.f32 %v385, %v386
    %v388 = vrot.slane %v387, 1
    %v389 = vadd.f32 %v387, %v388
    %v390 = vmul.f32 %v389, %v149
    %v391 = vsub.f32 %v380, %v390
    %v392 = vmul.f32 %v391, %v391
    %v393 = vsel %vm141, %v392, 0.0
    %v394 = vrot.slane %v393, 4
    %v395 = vadd.f32 %v393, %v394
    %v396 = vrot.slane %v395, 2
    %v397 = vadd.f32 %v395, %v396
    %v398 = vrot.slane %v397, 1
    %v399 = vadd.f32 %v397, %v398
    %v400 = vmul.f32 %v399, %v149
    %v401 = vld [vmem:[#allocation7 + $0x4] sm:$0x1]
    %v402 = vld [vmem:[#allocation7 + $0x5] sm:$0x1]
    %v403 = vadd.f32 %v400, 1e-05
    %v404 = vrsqrt.pop %v403
    %v405 = vmul.f32 %v401, %v404
    %v406 = vlaneseq
    %v407 = vshrl.u32 %v406, 7
    %v408 = vsub.s32 0, %v407
    %v409 = vrot.slane %v405, %v408
    %v410 = vmul.f32 %v391, %v409
    %v411 = vlaneseq
    %v412 = vshrl.u32 %v411, 7
    %v413 = vsub.s32 0, %v412
    %v414 = vrot.slane %v402, %v413
    %v415 = vadd.f32 %v410, %v414
    %v416 = vmax.f32 %v415, 0.0
    %v417 = vld [vmem:[#allocation5 + $0x180] sm:$0xff]
    %v418 = vld [vmem:[#allocation5 + $0x188] sm:$0xff]
    %v419 = vld [vmem:[#allocation5 + $0x190] sm:$0xff]
    %v420 = vld [vmem:[#allocation5 + $0x198] sm:$0xff]
    %v421 = vld [vmem:[#allocation5 + $0x1a0] sm:$0xff]
    %v422 = vld [vmem:[#allocation5 + $0x1a8] sm:$0xff]
    %v423 = vld [vmem:[#allocation5 + $0x1b0] sm:$0xff]
    %v424 = vld [vmem:[#allocation5 + $0x1b8] sm:$0xff]
    %v425 = vld [vmem:[#allocation5 + $0x1c0] sm:$0xff]
    %v426 = vld [vmem:[#allocation5 + $0x1c8] sm:$0xff]
    %v427 = vld [vmem:[#allocation5 + $0x1d0] sm:$0xff]
    %v428 = vld [vmem:[#allocation5 + $0x1d8] sm:$0xff]
    %v429 = vld [vmem:[#allocation5 + $0x1e0] sm:$0xff]
    %v430 = vld [vmem:[#allocation5 + $0x1e8] sm:$0xff]
    %v431 = vld [vmem:[#allocation5 + $0x1f0] sm:$0xff]
    %v432 = vld [vmem:[#allocation5 + $0x1f8] sm:$0xff]
    %433 = vmatprep.subr.mxu0 0.0
    %434 = vmatpush1.msra.mxu0 %v417
    %435 = vmatprep.subr.mxu0 0.0
    %436 = vmatpush1.msra.mxu0 %v418
    %437 = vmatprep.subr.mxu0 0.0
    %438 = vmatpush1.msra.mxu0 %v419
    %439 = vmatprep.subr.mxu0 0.0
    %440 = vmatpush1.msra.mxu0 %v420
    %441 = vmatprep.subr.mxu0 0.0
    %442 = vmatpush1.msra.mxu0 %v421
    %443 = vmatprep.subr.mxu0 0.0
    %444 = vmatpush1.msra.mxu0 %v422
    %445 = vmatprep.subr.mxu0 0.0
    %446 = vmatpush1.msra.mxu0 %v423
    %447 = vmatprep.subr.mxu0 0.0
    %448 = vmatpush1.msra.mxu0 %v424
    %449 = vmatprep.subr.mxu0 0.0
    %450 = vmatpush1.msra.mxu0 %v425
    %451 = vmatprep.subr.mxu0 0.0
    %452 = vmatpush1.msra.mxu0 %v426
    %453 = vmatprep.subr.mxu0 0.0
    %454 = vmatpush1.msra.mxu0 %v427
    %455 = vmatprep.subr.mxu0 0.0
    %456 = vmatpush1.msra.mxu0 %v428
    %457 = vmatprep.subr.mxu0 0.0
    %458 = vmatpush1.msra.mxu0 %v429
    %459 = vmatprep.subr.mxu0 0.0
    %460 = vmatpush1.msra.mxu0 %v430
    %461 = vmatprep.subr.mxu0 0.0
    %462 = vmatpush1.msra.mxu0 %v431
    %463 = vmatprep.subr.mxu0 0.0
    %464 = vmatpush1.msra.mxu0 %v432
    %465 = vmatprep.subr.mxu0 0.0
    %466 = vmatpush1.msra.mxu0 0.0
    %467 = vmatprep.subr.mxu0 0.0
    %468 = vmatpush1.msra.mxu0 0.0
    %469 = vmatprep.subr.mxu0 0.0
    %470 = vmatpush1.msra.mxu0 0.0
    %471 = vmatprep.subr.mxu0 0.0
    %472 = vmatpush1.msra.mxu0 0.0
    %473 = vmatprep.subr.mxu0 0.0
    %474 = vmatpush1.msra.mxu0 0.0
    %475 = vmatprep.subr.mxu0 0.0
    %476 = vmatpush1.msra.mxu0 0.0
    %477 = vmatprep.subr.mxu0 0.0
    %478 = vmatpush1.msra.mxu0 0.0
    %479 = vmatprep.subr.mxu0 0.0
    %480 = vmatpush1.msra.mxu0 0.0
    %481 = vmatprep.subr.mxu0 0.0
    %482 = vmatpush1.msra.mxu0 0.0
    %483 = vmatprep.subr.mxu0 0.0
    %484 = vmatpush1.msra.mxu0 0.0
    %485 = vmatprep.subr.mxu0 0.0
    %486 = vmatpush1.msra.mxu0 0.0
    %487 = vmatprep.subr.mxu0 0.0
    %488 = vmatpush1.msra.mxu0 0.0
    %489 = vmatprep.subr.mxu0 0.0
    %490 = vmatpush1.msra.mxu0 0.0
    %491 = vmatprep.subr.mxu0 0.0
    %492 = vmatpush1.msra.mxu0 0.0
    %493 = vmatprep.subr.mxu0 0.0
    %494 = vmatpush1.msra.mxu0 0.0
    %495 = vmatprep.subr.mxu0 0.0
    %496 = vmatpush1.msra.mxu0 0.0
    %497 = vmatprep.mubr.f32.mxu0 0.0
    %498 = vmatmul.mubr.f32.gmra.mrb[0].mxu0 %v416
    %v499 = vpop.f32.mrb[0].mxu0
    %v500 = vadd.f32 0.0, %v499
    %v501 = vpop.f32.mrb[0].mxu0
    %502 = vdwg.mxu0
    %v503 = vsel %vm141, %v500, 0.0
    %v504 = vrot.slane %v503, 4
    %v505 = vadd.f32 %v503, %v504
    %v506 = vrot.slane %v505, 2
    %v507 = vadd.f32 %v505, %v506
    %v508 = vrot.slane %v507, 1
    %v509 = vadd.f32 %v507, %v508
    %v510 = vmul.f32 %v509, %v149
    %v511 = vsub.f32 %v500, %v510
    %v512 = vmul.f32 %v511, %v511
    %v513 = vsel %vm141, %v512, 0.0
    %v514 = vrot.slane %v513, 4
    %v515 = vadd.f32 %v513, %v514
    %v516 = vrot.slane %v515, 2
    %v517 = vadd.f32 %v515, %v516
    %v518 = vrot.slane %v517, 1
    %v519 = vadd.f32 %v517, %v518
    %v520 = vmul.f32 %v519, %v149
    %v521 = vld [vmem:[#allocation7 + $0x6] sm:$0x1]
    %v522 = vld [vmem:[#allocation7 + $0x7] sm:$0x1]
    %v523 = vadd.f32 %v520, 1e-05
    %v524 = vrsqrt.pop %v523
    %v525 = vmul.f32 %v521, %v524
    %v526 = vlaneseq
    %v527 = vshrl.u32 %v526, 7
    %v528 = vsub.s32 0, %v527
    %v529 = vrot.slane %v525, %v528
    %v530 = vmul.f32 %v511, %v529
    %v531 = vlaneseq
    %v532 = vshrl.u32 %v531, 7
    %v533 = vsub.s32 0, %v532
    %v534 = vrot.slane %v522, %v533
    %v535 = vadd.f32 %v530, %v534
    %v536 = vmax.f32 %v535, 0.0
    %v537 = vld [vmem:[#allocation5 + $0x200] sm:$0xff]
    %v538 = vld [vmem:[#allocation5 + $0x208] sm:$0xff]
    %v539 = vld [vmem:[#allocation5 + $0x210] sm:$0xff]
    %v540 = vld [vmem:[#allocation5 + $0x218] sm:$0xff]
    %v541 = vld [vmem:[#allocation5 + $0x220] sm:$0xff]
    %v542 = vld [vmem:[#allocation5 + $0x228] sm:$0xff]
    %v543 = vld [vmem:[#allocation5 + $0x230] sm:$0xff]
    %v544 = vld [vmem:[#allocation5 + $0x238] sm:$0xff]
    %v545 = vld [vmem:[#allocation5 + $0x240] sm:$0xff]
    %v546 = vld [vmem:[#allocation5 + $0x248] sm:$0xff]
    %v547 = vld [vmem:[#allocation5 + $0x250] sm:$0xff]
    %v548 = vld [vmem:[#allocation5 + $0x258] sm:$0xff]
    %v549 = vld [vmem:[#allocation5 + $0x260] sm:$0xff]
    %v550 = vld [vmem:[#allocation5 + $0x268] sm:$0xff]
    %v551 = vld [vmem:[#allocation5 + $0x270] sm:$0xff]
    %v552 = vld [vmem:[#allocation5 + $0x278] sm:$0xff]
    %v553 = vld [vmem:[#allocation7 + $0x8] sm:$0x1]
    %v554 = vlaneseq
    %v555 = vshrl.u32 %v554, 7
    %v556 = vsub.s32 0, %v555
    %v557 = vrot.slane %v553, %v556
    %558 = vmatprep.subr.mxu0 0.0
    %559 = vmatpush1.msra.mxu0 %v537
    %560 = vmatprep.subr.mxu0 0.0
    %561 = vmatpush1.msra.mxu0 %v538
    %562 = vmatprep.subr.mxu0 0.0
    %563 = vmatpush1.msra.mxu0 %v539
    %564 = vmatprep.subr.mxu0 0.0
    %565 = vmatpush1.msra.mxu0 %v540
    %566 = vmatprep.subr.mxu0 0.0
    %567 = vmatpush1.msra.mxu0 %v541
    %568 = vmatprep.subr.mxu0 0.0
    %569 = vmatpush1.msra.mxu0 %v542
    %570 = vmatprep.subr.mxu0 0.0
    %571 = vmatpush1.msra.mxu0 %v543
    %572 = vmatprep.subr.mxu0 0.0
    %573 = vmatpush1.msra.mxu0 %v544
    %574 = vmatprep.subr.mxu0 0.0
    %575 = vmatpush1.msra.mxu0 %v545
    %576 = vmatprep.subr.mxu0 0.0
    %577 = vmatpush1.msra.mxu0 %v546
    %578 = vmatprep.subr.mxu0 0.0
    %579 = vmatpush1.msra.mxu0 %v547
    %580 = vmatprep.subr.mxu0 0.0
    %581 = vmatpush1.msra.mxu0 %v548
    %582 = vmatprep.subr.mxu0 0.0
    %583 = vmatpush1.msra.mxu0 %v549
    %584 = vmatprep.subr.mxu0 0.0
    %585 = vmatpush1.msra.mxu0 %v550
    %586 = vmatprep.subr.mxu0 0.0
    %587 = vmatpush1.msra.mxu0 %v551
    %588 = vmatprep.subr.mxu0 0.0
    %589 = vmatpush1.msra.mxu0 %v552
    %590 = vmatprep.subr.mxu0 0.0
    %591 = vmatpush1.msra.mxu0 0.0
    %592 = vmatprep.subr.mxu0 0.0
    %593 = vmatpush1.msra.mxu0 0.0
    %594 = vmatprep.subr.mxu0 0.0
    %595 = vmatpush1.msra.mxu0 0.0
    %596 = vmatprep.subr.mxu0 0.0
    %597 = vmatpush1.msra.mxu0 0.0
    %598 = vmatprep.subr.mxu0 0.0
    %599 = vmatpush1.msra.mxu0 0.0
    %600 = vmatprep.subr.mxu0 0.0
    %601 = vmatpush1.msra.mxu0 0.0
    %602 = vmatprep.subr.mxu0 0.0
    %603 = vmatpush1.msra.mxu0 0.0
    %604 = vmatprep.subr.mxu0 0.0
    %605 = vmatpush1.msra.mxu0 0.0
    %606 = vmatprep.subr.mxu0 0.0
    %607 = vmatpush1.msra.mxu0 0.0
    %608 = vmatprep.subr.mxu0 0.0
    %609 = vmatpush1.msra.mxu0 0.0
    %610 = vmatprep.subr.mxu0 0.0
    %611 = vmatpush1.msra.mxu0 0.0
    %612 = vmatprep.subr.mxu0 0.0
    %613 = vmatpush1.msra.mxu0 0.0
    %614 = vmatprep.subr.mxu0 0.0
    %615 = vmatpush1.msra.mxu0 0.0
    %616 = vmatprep.subr.mxu0 0.0
    %617 = vmatpush1.msra.mxu0 0.0
    %618 = vmatprep.subr.mxu0 0.0
    %619 = vmatpush1.msra.mxu0 0.0
    %620 = vmatprep.subr.mxu0 0.0
    %621 = vmatpush1.msra.mxu0 0.0
    %622 = vmatprep.mubr.f32.mxu0 0.0
    %623 = vmatmul.mubr.f32.gmra.mrb[0].mxu0 %v536
    %v624 = vpop.f32.mrb[0].mxu0
    %v625 = vadd.f32 %v557, %v624
    %v626 = vpop.f32.mrb[0].mxu0
    %627 = vdwg.mxu0
    %v628 = vtanh.pop %v625
    %629 = vst [vmem:[#allocation8] sm:$0x3] %v628
    // Predicated region
    $region26: #{tpu_custom_call.1} parent=1 // pred_check
      _
    $region27: #{tpu_custom_call.1} parent=1 // pred_check_branch
      %631 = sbr.rel (0) target = $region29
    $region28: #{tpu_custom_call.1} parent=1 // pred_region
      %s633 = ssub.s32 32, 32
      %634 = vsyncadd [#allocation4], %s633
      %s636 = sshll.u32 [#allocation8], 4
      %s637 = int_to_ptr.vmem [resolvable:$true] %s636
      %639 = dma.vmem_to_hbm [thread:$0]  %s637, 32, %s3, [#allocation4]
    $region29: #{tpu_custom_call.1} parent=1 // pred_fallthru
      _
    // Predicated region
    $region30: #{tpu_custom_call.1} parent=1 // pred_check
      _
    $region31: #{tpu_custom_call.1} parent=1 // pred_check_branch
      %641 = sbr.rel (0) target = $region33
    $region32: #{tpu_custom_call.1} parent=1 // pred_region
      %642 = dma.done [#allocation4], 32
    $region33: #{tpu_custom_call.1} parent=1 // pred_fallthru
      _
    %643 = vsyncpa [#allocation3], 1
    %644 = vsyncpa [#allocation6], 1
    %645 = vsyncpa [#allocation4], 1

</llo_original>
